<compile_context>
chip_gen: v7x
topology: tpu7x:2x2x1
jax: 0.10.0
libtpu: 0.0.40
codegen_flags: <defaults>
</compile_context>

<pallas_src>
import math
import functools

import jax
import jax.numpy as jnp
from jax import lax
from jax.experimental import pallas as pl
from jax.experimental.pallas import tpu as pltpu


def _build_pe_table(d_model: int, max_len: int) -> jnp.ndarray:
    """Sinusoidal positional-encoding table, shape (max_len, 1, d_model)."""
    position = jnp.arange(0, max_len, dtype=jnp.float32)[:, None]                # (L, 1)
    div_term = jnp.exp(
        jnp.arange(0, d_model, 2, dtype=jnp.float32) * (-math.log(10000.0) / d_model)
    )                                                                            # (D/2,)
    pe = jnp.zeros((max_len, d_model), dtype=jnp.float32)
    pe = pe.at[:, 0::2].set(jnp.sin(position * div_term))
    pe = pe.at[:, 1::2].set(jnp.cos(position * div_term))
    return pe[:, None, :]                                                        # (L, 1, D)


def _random_u32(seed, row, col):
    """Counter-based per-element 32-bit hash (murmur3-style finalizer).

    Only integer mul/xor/shift -> lowers on Mosaic TPU *and* in interpret mode.
    """
    x = row.astype(jnp.uint32) * jnp.uint32(0x9E3779B1)
    x = x ^ (col.astype(jnp.uint32) * jnp.uint32(0x85EBCA77))
    x = x ^ seed.astype(jnp.uint32)
    x = x ^ (x >> 16)
    x = x * jnp.uint32(0x7FEB352D)
    x = x ^ (x >> 15)
    x = x * jnp.uint32(0x846CA68B)
    x = x ^ (x >> 16)
    return x


def _pe_dropout_kernel(seed_ref, x_ref, pe_ref, o_ref, *, p, training, block_rows):
    # x_ref: (tS, B, D) or (tS, B*D); pe_ref broadcasts against it.
    y = x_ref[...] + pe_ref[...]

    if training and p > 0.0:
        shape = x_ref.shape
        # Global element coordinates: folding pl.program_id(0) into the row gives
        # every tile an independent dropout mask.
        row = lax.broadcasted_iota(jnp.int32, shape, 0) + pl.program_id(0) * block_rows
        if len(shape) == 3:
            col = (lax.broadcasted_iota(jnp.int32, shape, 1) * shape[2]
                   + lax.broadcasted_iota(jnp.int32, shape, 2))
        else:
            col = lax.broadcasted_iota(jnp.int32, shape, 1)
        bits = _random_u32(seed_ref[0], row, col)
        # Integer threshold: keep with prob (1 - p).
        threshold = jnp.uint32(min(int(round(p * 2.0 ** 32)), 2 ** 32 - 1))
        keep = bits >= threshold
        y = jnp.where(keep, y * (1.0 / (1.0 - p)), jnp.zeros_like(y))

    o_ref[...] = y.astype(o_ref.dtype)


def positional_encoding_forward(x, pe_table, *, dropout_p=0.1, training=False,
                                seed=0, target_block_bytes=4 * 1024 * 1024):
    """x: (S, B, D).  Returns dropout(x + pe[:S]) with layout (S, B, D)."""
    S, B, D = x.shape
    pe_slice = pe_table[:S, 0, :].astype(x.dtype)          # (S, D)
    seed_arr = jnp.array([seed], dtype=jnp.int32)

    lane_dense = (D % 128 == 0)
    if lane_dense:
        # d_model already fills full 128-lane vregs: keep (S, B, D) blocks and
        # broadcast pe (tS, 1, D) inside the kernel (pe HBM traffic stays S*D).
        xk = x
        pek = pe_slice[:, None, :]                          # (S, 1, D)
    else:
        # Small d_model: flatten (B, D) into the lane axis so stores are lane-dense.
        xk = x.reshape(S, B * D)
        pek = jnp.tile(pe_slice, (1, B))                    # (S, B*D)

    # Tile the sequence axis; size blocks for ~target_block_bytes each so the
    # double-buffered pipeline stays well under a 32 MiB VMEM budget (safe on
    # v5e/v6e/v7x) while staying large enough to sit near the HBM roofline.
    itemsize = jnp.dtype(x.dtype).itemsize
    row_bytes = max(B * D * itemsize, 1)
    tS = max(8, (target_block_bytes // row_bytes) // 8 * 8)
    tS = min(tS, S)
    grid = (pl.cdiv(S, tS),)

    if lane_dense:
        x_spec = pl.BlockSpec((tS, B, D), lambda i: (i, 0, 0))
        pe_spec = pl.BlockSpec((tS, 1, D), lambda i: (i, 0, 0))
        out_spec = pl.BlockSpec((tS, B, D), lambda i: (i, 0, 0))
        out_shape = jax.ShapeDtypeStruct((S, B, D), x.dtype)
    else:
        x_spec = pl.BlockSpec((tS, B * D), lambda i: (i, 0))
        pe_spec = pl.BlockSpec((tS, B * D), lambda i: (i, 0))
        out_spec = pl.BlockSpec((tS, B * D), lambda i: (i, 0))
        out_shape = jax.ShapeDtypeStruct((S, B * D), x.dtype)

    kernel = functools.partial(_pe_dropout_kernel, p=float(dropout_p),
                               training=bool(training), block_rows=int(tS))

    y = pl.pallas_call(
        kernel,
        out_shape=out_shape,
        grid=grid,
        in_specs=[
            pl.BlockSpec(memory_space=pltpu.SMEM),          # seed (scalar, SMEM)
            x_spec,
            pe_spec,
        ],
        out_specs=out_spec,
        input_output_aliases={1: 0},                        # x aliases the output
        compiler_params=pltpu.CompilerParams(
            dimension_semantics=("parallel",),
            vmem_limit_bytes=32 * 1024 * 1024,
        ),
    )(seed_arr, xk, pek)

    if not lane_dense:
        y = y.reshape(S, B, D)
    return y


if __name__ == "__main__":
    d_model = 32
    max_len = 5000
    seq_len = 8
    batch = 2
    p = 0.1

    pe_table = _build_pe_table(d_model, max_len)
    key = jax.random.PRNGKey(0)
    x = jax.random.normal(key, (seq_len, batch, d_model), dtype=jnp.float32)

    # --- eval mode (dropout = identity): exact match to x + pe[:S] -------------
    y_eval = jax.block_until_ready(
        positional_encoding_forward(x, pe_table, dropout_p=p, training=False))
    ref = x + pe_table[:seq_len]
    assert y_eval.shape == (seq_len, batch, d_model)
    assert jnp.allclose(y_eval, ref, atol=1e-6), "eval-mode mismatch vs reference"

    # --- training mode: in-kernel inverted dropout (own RNG stream) ------------
    y_train = jax.block_until_ready(
        positional_encoding_forward(x, pe_table, dropout_p=p, training=True, seed=123))
    scaled = ref / (1.0 - p)
    ok = jnp.all(jnp.isclose(y_train, scaled, rtol=1e-5, atol=1e-5) | (y_train == 0.0))
    assert bool(ok), "training-mode dropout values inconsistent"
    drop_frac = float(jnp.mean((y_train == 0.0).astype(jnp.float32)))
    assert 0.0 < drop_frac < 0.5, f"dropout rate looks wrong: {drop_frac}"

    # --- lane-dense path (d_model % 128 == 0): exercises the 3-D block layout --
    d2, s2, b2 = 128, 16, 2
    pe2 = _build_pe_table(d2, 64)
    x2 = jax.random.normal(jax.random.PRNGKey(1), (s2, b2, d2), dtype=jnp.float32)
    y2 = jax.block_until_ready(
        positional_encoding_forward(x2, pe2, dropout_p=p, training=False))
    assert jnp.allclose(y2, x2 + pe2[:s2], atol=1e-6), "3-D path mismatch"

    print("KERNEL_OK")
</pallas_src>

<mosaic_0001>
module attributes {stable_mosaic.version = 11 : i64} {
  func.func @_pe_dropout_kernel(%arg0: i32, %arg1: memref<1xi32, #tpu.memory_space<smem>>, %arg2: memref<8x64xf32, #tpu.memory_space<vmem>>, %arg3: memref<8x64xf32, #tpu.memory_space<vmem>>, %arg4: memref<8x64xf32, #tpu.memory_space<vmem>>) attributes {dimension_semantics = [#tpu.dimension_semantics<parallel>], iteration_bounds = array<i64: 1>, scalar_prefetch = 0 : i64, scratch_operands = 0 : i64, tpu.core_type = #tpu.core_type<tc>, window_params = [{transform_indices = @transform_0, window_bounds = array<i64: 1>}, {transform_indices = @transform_1, window_bounds = array<i64: 8, 64>}, {transform_indices = @transform_2, window_bounds = array<i64: 8, 64>}, {transform_indices = @transform_3, window_bounds = array<i64: 8, 64>}]} {
    %c0 = arith.constant 0 : index
    %c0_0 = arith.constant 0 : index
    %0 = vector.load %arg2[%c0, %c0_0] : memref<8x64xf32, #tpu.memory_space<vmem>>, vector<8x64xf32>
    %c0_1 = arith.constant 0 : index
    %c0_2 = arith.constant 0 : index
    %1 = vector.load %arg3[%c0_1, %c0_2] : memref<8x64xf32, #tpu.memory_space<vmem>>, vector<8x64xf32>
    %2 = arith.addf %0, %1 : vector<8x64xf32>
    %c0_3 = arith.constant 0 : index
    %c0_4 = arith.constant 0 : index
    %3 = vector.load %arg4[%c0_3, %c0_4] : memref<8x64xf32, #tpu.memory_space<vmem>>, vector<8x64xf32>
    tpu.vector_store %arg4[%c0_3, %c0_4], %2 {strides = array<i32>} : memref<8x64xf32, #tpu.memory_space<vmem>>, vector<8x64xf32>,
    return
  }
  func.func @transform_0(%arg0: i32) -> i32 {
    %c0_i32 = arith.constant 0 : i32
    %c0_i32_0 = arith.constant 0 : i32
    return %c0_i32 : i32
  }
  func.func @transform_1(%arg0: i32) -> (i32, i32) {
    %c0_i32 = arith.constant 0 : i32
    %c0_i32_0 = arith.constant 0 : i32
    return %arg0, %c0_i32 : i32, i32
  }
  func.func @transform_2(%arg0: i32) -> (i32, i32) {
    %c0_i32 = arith.constant 0 : i32
    %c0_i32_0 = arith.constant 0 : i32
    return %arg0, %c0_i32 : i32, i32
  }
  func.func @transform_3(%arg0: i32) -> (i32, i32) {
    %c0_i32 = arith.constant 0 : i32
    %c0_i32_0 = arith.constant 0 : i32
    return %arg0, %c0_i32 : i32, i32
  }
}

</mosaic_0001>

<llo_original>
// kernel: tpu_custom_call.1
$region0: #{tpu_custom_call.1}
  #allocation0 [shape = 'u32[]', space=smem, size = 0x4, offset = 0x4, fixed_abs, tag = 'smem constant byte address 0x4 - core index']
  #allocation1 [shape = 'u32[144,128]{1,0:T(1,128)}', space=vmem, size = 0x12000, scoped, tag = 'internal scratch']
  #allocation2 [shape = 's32[1]{0:T(128)S(6)}', space=smem, size = 0x200, scoped, tag = 'scoped memory for tpu_custom_call.1']
  %s0 = inlined_call_operand.<no memory space> [shape: s32[1], index: 0, kind: input, shape index: {}]
  %s1 = inlined_call_operand.hbm [shape: f32[8,64], index: 1, kind: input, shape index: {}, may-alias: {1,3}]
  %s2 = inlined_call_operand.vmem [shape: f32[8,64], index: 2, kind: input, shape index: {}]
  %s3 = inlined_call_operand.hbm [shape: f32[8,64], index: 3, kind: output, shape index: {}, may-alias: {1,3}]
  %s4 = sld [smem:[#allocation0]]
  $region26: #{tpu_custom_call.1} parent=0
    _
  %s6 = ssub.s32 1, %s4
  %s7 = scalar_select 0, %s6, %s4
  %8 = sst [smem:[#allocation2]] %s0
  $region1: #{tpu_custom_call.1} parent=0
    #allocation3 [shape = 'u8[4096]{0}', space=vmem, size = 0x1000, scoped, tag = 'input window, operand 1, single buffered']
    #allocation4 [shape = 's32[1]{0}', space=sflag, size = 0x4, scoped, tag = 'scoped memory for tpu_custom_call.1']
    #allocation5 [shape = 's32[1]{0}', space=sflag, size = 0x4, scoped, tag = 'scoped memory for tpu_custom_call.1']
    #allocation6 [shape = 'u8[4096]{0}', space=vmem, size = 0x1000, scoped, tag = 'output window, operand 0, single buffered']
    %9 = vsyncpa [#allocation4], 0
    %10 = vsyncpa [#allocation5], 0
    // Predicated region
    $region2: #{tpu_custom_call.1} parent=1 // pred_check
      _
    $region3: #{tpu_custom_call.1} parent=1 // pred_check_branch
      %12 = sbr.rel (0) target = $region5
    $region4: #{tpu_custom_call.1} parent=1 // pred_region
      _
    $region5: #{tpu_custom_call.1} parent=1 // pred_fallthru
      _
    // Predicated region
    $region6: #{tpu_custom_call.1} parent=1 // pred_check
      _
    $region7: #{tpu_custom_call.1} parent=1 // pred_check_branch
      %14 = sbr.rel (0) target = $region9
    $region8: #{tpu_custom_call.1} parent=1 // pred_region
      %s16 = ssub.s32 128, 128
      %17 = vsyncadd [#allocation4], %s16
      %s19 = sshll.u32 [#allocation3], 4
      %s20 = int_to_ptr.vmem [resolvable:$true] %s19
      %22 = dma.hbm_to_vmem [thread:$0]  %s1, 128, %s20, [#allocation4]
    $region9: #{tpu_custom_call.1} parent=1 // pred_fallthru
      _
    // Predicated region
    $region10: #{tpu_custom_call.1} parent=1 // pred_check
      _
    $region11: #{tpu_custom_call.1} parent=1 // pred_check_branch
      %24 = sbr.rel (0) target = $region13
    $region12: #{tpu_custom_call.1} parent=1 // pred_region
      _
    $region13: #{tpu_custom_call.1} parent=1 // pred_fallthru
      _
    // Predicated region
    $region14: #{tpu_custom_call.1} parent=1 // pred_check
      _
    $region15: #{tpu_custom_call.1} parent=1 // pred_check_branch
      %26 = sbr.rel (0) target = $region17
    $region16: #{tpu_custom_call.1} parent=1 // pred_region
      %27 = dma.done [#allocation4], 128
    $region17: #{tpu_custom_call.1} parent=1 // pred_fallthru
      _
    %v28 = vld [vmem:[#allocation3] sm:$0xff]
    %v29 = vld [vmem:[%s2] sm:$0xff]
    %v30 = vadd.f32 %v28, %v29
    %vm31 = vcmask 523264
    %32 = vst.msk [vmem:[#allocation6] sm:$0xff] %vm31, %v30
    // Predicated region
    $region18: #{tpu_custom_call.1} parent=1 // pred_check
      _
    $region19: #{tpu_custom_call.1} parent=1 // pred_check_branch
      %34 = sbr.rel (0) target = $region21
    $region20: #{tpu_custom_call.1} parent=1 // pred_region
      %s36 = ssub.s32 128, 128
      %37 = vsyncadd [#allocation5], %s36
      %s39 = sshll.u32 [#allocation6], 4
      %s40 = int_to_ptr.vmem [resolvable:$true] %s39
      %42 = dma.vmem_to_hbm [thread:$0]  %s40, 128, %s3, [#allocation5]
    $region21: #{tpu_custom_call.1} parent=1 // pred_fallthru
      _
    // Predicated region
    $region22: #{tpu_custom_call.1} parent=1 // pred_check
      _
    $region23: #{tpu_custom_call.1} parent=1 // pred_check_branch
      %44 = sbr.rel (0) target = $region25
    $region24: #{tpu_custom_call.1} parent=1 // pred_region
      %45 = dma.done [#allocation5], 128
    $region25: #{tpu_custom_call.1} parent=1 // pred_fallthru
      _
    %46 = vsyncpa [#allocation4], 1
    %47 = vsyncpa [#allocation5], 1

</llo_original>
